<compile_context>
chip_gen: v6e
topology: v6e:2x2x1
jax: 0.10.0
libtpu: 0.0.40
codegen_flags: <defaults>
</compile_context>

<pallas_src>
import jax
import jax.numpy as jnp
from jax.experimental import pallas as pl
from jax.experimental.pallas import tpu as pltpu

LN_EPS = 1e-5    # nn.LayerNorm default
LANE = 128       # TPU lane width  (last dim)
SUBLANE = 8      # TPU sublane     (second-to-last dim)


def _round_up(x, m):
    return ((x + m - 1) // m) * m


def _physical_vmem_bytes():
    try:
        return int(pltpu.get_tpu_info().vmem_capacity_bytes)
    except Exception:
        return 64 * 1024 * 1024  # safe lower bound (v7x per-TC VMEM)


# ---------------------------------------------------------------------------
# Fused MLP kernel:  x -> [Linear -> LayerNorm -> SiLU]* -> Linear
# ---------------------------------------------------------------------------
def _make_mlp_kernel(hidden_true):
    n_hidden = len(hidden_true)

    def kernel(*refs):
        x_ref = refs[0]
        layer_refs = refs[1:1 + 2 * n_hidden]      # (w, packed[bias;gamma;beta]) / layer
        w_out_ref = refs[1 + 2 * n_hidden]
        b_out_ref = refs[2 + 2 * n_hidden]
        out_ref = refs[3 + 2 * n_hidden]

        h = x_ref[...]                              # bf16, padded lanes are zero
        for i in range(n_hidden):
            w_ref = layer_refs[2 * i]
            bgb_ref = layer_refs[2 * i + 1]
            h_true = hidden_true[i]

            bias = bgb_ref[0:1, :]                  # row 0: Linear bias
            gamma = bgb_ref[1:2, :]                 # row 1: LayerNorm weight
            beta = bgb_ref[2:3, :]                  # row 2: LayerNorm bias

            # Linear: bf16 x bf16 on the MXU, f32 accumulation.
            z = jnp.dot(h, w_ref[...], preferred_element_type=jnp.float32) + bias

            # LayerNorm over the TRUE feature count; padded lanes of z are
            # exactly zero (zero weight columns / bias), so padded-width sums
            # equal true-width sums -> mask-free statistics.
            inv_h = jnp.float32(1.0 / h_true)
            mean = jnp.sum(z, axis=-1, keepdims=True) * inv_h
            ex2 = jnp.sum(z * z, axis=-1, keepdims=True) * inv_h
            var = jnp.maximum(ex2 - mean * mean, 0.0)
            zn = (z - mean) * jax.lax.rsqrt(var + LN_EPS)
            a = zn * gamma + beta                   # gamma/beta zero padded lanes

            # SiLU: a * sigmoid(a); sigmoid via a single EUP tanh.
            sig = 0.5 * jnp.tanh(0.5 * a) + 0.5
            h = (a * sig).astype(jnp.bfloat16)
            # TODO(synk): nn.Dropout skipped (inference / eval semantics).

        z = jnp.dot(h, w_out_ref[...], preferred_element_type=jnp.float32) + b_out_ref[...]
        out_ref[...] = z.astype(out_ref.dtype)

    return kernel


# ---------------------------------------------------------------------------
# Tiny L2(weights) kernel (Linear weights + LayerNorm gammas, like PyTorch
# summing every parameter whose name contains 'weight').
# ---------------------------------------------------------------------------
def _make_l2_kernel(n_hidden):
    def kernel(*refs):
        out_ref = refs[-1]
        total = jnp.float32(0.0)
        for i in range(n_hidden):
            w = refs[2 * i][...].astype(jnp.float32)
            gamma = refs[2 * i + 1][1:2, :]          # row 1 of the packed block
            total = total + jnp.sum(w * w) + jnp.sum(gamma * gamma)
        w_out = refs[2 * n_hidden][...].astype(jnp.float32)
        total = total + jnp.sum(w_out * w_out)
        out_ref[0, 0] = total
    return kernel


# ---------------------------------------------------------------------------
# Wrapper
# ---------------------------------------------------------------------------
def fc_layer_forward(params, x):
    """Returns (output, l2_reg_loss) — matches FCLayer.forward (eval mode)."""
    dims = params["dims"]
    hidden_pad = dims["hidden_pad"]
    d_in, d_in_p = dims["input"], dims["input_pad"]
    d_out, d_out_p = dims["output"], dims["output_pad"]
    max_feat = max((d_in_p, d_out_p) + tuple(hidden_pad))

    # --- single-buffered weight footprint -----------------------------------
    weight_bytes = 0
    prev_p = d_in_p
    for hp in hidden_pad:
        weight_bytes += prev_p * hp * 2 + SUBLANE * hp * 4
        prev_p = hp
    weight_bytes += prev_p * d_out_p * 2 + SUBLANE * d_out_p * 4

    phys_vmem = _physical_vmem_bytes()

    # --- batch tiling: tile cap from VMEM budget, minimize padded rows ------
    B = x.shape[0]
    b_pad8 = _round_up(B, SUBLANE)
    per_row = 2 * d_in_p * 2 + 2 * d_out_p * 4 + 6 * max_feat * 4
    act_budget = max(4 << 20, min(phys_vmem, 128 << 20) // 2 - weight_bytes)
    cap = max(SUBLANE, min(1024, (int(act_budget // per_row) // SUBLANE) * SUBLANE))

    best = None
    for t in range(min(cap, b_pad8), 0, -SUBLANE):
        padded = _round_up(b_pad8, t)
        steps = padded // t
        cost = padded + 32 * steps        # padded work + per-grid-step overhead proxy
        if best is None or cost < best[0]:
            best = (cost, t, padded)
    _, tile_b, b_pad = best
    grid = b_pad // tile_b

    # bf16 input: halves the per-tile HBM input stream; padded lanes stay zero.
    xp = jnp.zeros((b_pad, d_in_p), jnp.bfloat16).at[:B, :d_in].set(
        x.astype(jnp.bfloat16))

    const_buf = pl.Buffered(1)            # weights never change across the grid
    inputs = [xp]
    in_specs = [pl.BlockSpec((tile_b, d_in_p), lambda i: (i, 0))]
    prev_p = d_in_p
    for (w, bgb), hp in zip(params["hidden"], hidden_pad):
        inputs += [w, bgb]
        in_specs += [
            pl.BlockSpec((prev_p, hp), lambda i: (0, 0), pipeline_mode=const_buf),
            pl.BlockSpec((SUBLANE, hp), lambda i: (0, 0), pipeline_mode=const_buf),
        ]
        prev_p = hp
    w_out, b_out = params["final"]
    inputs += [w_out, b_out]
    in_specs += [
        pl.BlockSpec((prev_p, d_out_p), lambda i: (0, 0), pipeline_mode=const_buf),
        pl.BlockSpec((1, d_out_p), lambda i: (0, 0), pipeline_mode=const_buf),
    ]

    # --- footprint-derived VMEM limit, clamped under physical VMEM ----------
    vmem_needed = (weight_bytes
                   + 2 * tile_b * d_in_p * 2      # double-buffered bf16 input tile
                   + 2 * tile_b * d_out_p * 4     # double-buffered f32 output tile
                   + 6 * tile_b * max_feat * 4)   # activation temporaries headroom
    vmem_limit = int(min(max(vmem_needed + (8 << 20), 32 << 20),
                         phys_vmem - (4 << 20)))

    kernel = _make_mlp_kernel(tuple(dims["hidden"]))

    out_p = pl.pallas_call(
        kernel,
        grid=(grid,),
        in_specs=in_specs,
        out_specs=pl.BlockSpec((tile_b, d_out_p), lambda i: (i, 0)),
        out_shape=jax.ShapeDtypeStruct((b_pad, d_out_p), jnp.float32),
        compiler_params=pltpu.CompilerParams(
            # L2 was moved out of this kernel, so the batch axis is purely
            # data-parallel -> megacore sharding on v7x.
            dimension_semantics=("parallel",),
            vmem_limit_bytes=vmem_limit,
        ),
    )(*inputs)

    # L2 regularization over every 'weight' parameter, in its own tiny kernel.
    # Padded weight entries are zero so the sum is exact over true sizes.
    l2_inputs, l2_specs = [], []
    for (w, bgb) in params["hidden"]:
        l2_inputs += [w, bgb]
        l2_specs += [pl.BlockSpec(w.shape, lambda i: (0, 0)),
                     pl.BlockSpec(bgb.shape, lambda i: (0, 0))]
    l2_inputs.append(w_out)
    l2_specs.append(pl.BlockSpec(w_out.shape, lambda i: (0, 0)))

    l2 = pl.pallas_call(
        _make_l2_kernel(len(params["hidden"])),
        grid=(1,),
        in_specs=l2_specs,
        out_specs=pl.BlockSpec((1, 1), lambda i: (0, 0), memory_space=pltpu.SMEM),
        out_shape=jax.ShapeDtypeStruct((1, 1), jnp.float32),
    )(*l2_inputs)

    return out_p[:B, :d_out], l2[0, 0]


# ---------------------------------------------------------------------------
# Parameter construction (mirrors FCLayer.__init__ / _init_weights), pre-padded
# to lane/sublane multiples so the kernel stays lane-dense.
# ---------------------------------------------------------------------------
def init_fc_layer_params(key, input_size, hidden_sizes, output_size,
                         weight_dtype=jnp.bfloat16):
    hidden_sizes = tuple(hidden_sizes)
    d_in_p = _round_up(input_size, LANE)
    hidden_pad = tuple(_round_up(h, LANE) for h in hidden_sizes)
    d_out_p = _round_up(output_size, LANE)

    gain = 2.0 ** 0.5  # kaiming_normal_, mode='fan_in', nonlinearity='leaky_relu' (a=0)
    hidden = []
    prev, prev_p = input_size, d_in_p
    for h, hp in zip(hidden_sizes, hidden_pad):
        key, kw, kb = jax.random.split(key, 3)
        if h != 1:
            std = gain / (prev ** 0.5)
            w = jax.random.normal(kw, (prev, h), jnp.float32) * std        # (in, out)
            b = jnp.zeros((h,), jnp.float32)
        else:   # out_features == 1: PyTorch keeps the default nn.Linear init.
            bound = 1.0 / (prev ** 0.5)
            w = jax.random.uniform(kw, (prev, h), jnp.float32, -bound, bound)
            b = jax.random.uniform(kb, (h,), jnp.float32, -bound, bound)
        w = jnp.zeros((prev_p, hp), jnp.float32).at[:prev, :h].set(w)
        # Packed per-layer vectors: row 0 = Linear bias, row 1 = LN gamma, row 2 = LN beta.
        bgb = jnp.zeros((SUBLANE, hp), jnp.float32).at[0, :h].set(b).at[1, :h].set(1.0)
        hidden.append((w.astype(weight_dtype), bgb))
        prev, prev_p = h, hp

    key, kw, kb = jax.random.split(key, 3)
    if output_size != 1:
        std = gain / (prev ** 0.5)
        w_out = jax.random.normal(kw, (prev, output_size), jnp.float32) * std
        b_out = jnp.zeros((1, output_size), jnp.float32)
    else:
        bound = 1.0 / (prev ** 0.5)
        w_out = jax.random.uniform(kw, (prev, output_size), jnp.float32, -bound, bound)
        b_out = jax.random.uniform(kb, (1, output_size), jnp.float32, -bound, bound)
    w_out_p = jnp.zeros((prev_p, d_out_p), jnp.float32).at[:prev, :output_size].set(w_out)
    b_out_p = jnp.zeros((1, d_out_p), jnp.float32).at[:, :output_size].set(b_out)

    return {
        "hidden": hidden,
        "final": (w_out_p.astype(weight_dtype), b_out_p),
        "dims": {
            "input": input_size, "input_pad": d_in_p,
            "hidden": hidden_sizes, "hidden_pad": hidden_pad,
            "output": output_size, "output_pad": d_out_p,
        },
    }


# ---------------------------------------------------------------------------
# Pure-JAX reference (same bf16 weights / matmul dtypes) for a loose check.
# ---------------------------------------------------------------------------
def _reference_forward(params, x):
    dims = params["dims"]
    d_in, d_in_p = dims["input"], dims["input_pad"]
    h = jnp.zeros((x.shape[0], d_in_p), jnp.bfloat16).at[:, :d_in].set(
        x.astype(jnp.bfloat16))
    for (w, bgb), h_true in zip(params["hidden"], dims["hidden"]):
        z = jnp.dot(h, w, preferred_element_type=jnp.float32) + bgb[0:1]
        zt = z[:, :h_true]
        mean = jnp.mean(zt, axis=-1, keepdims=True)
        var = jnp.mean((zt - mean) ** 2, axis=-1, keepdims=True)
        a = (z - mean) * jax.lax.rsqrt(var + LN_EPS) * bgb[1:2] + bgb[2:3]
        h = (a * jax.nn.sigmoid(a)).astype(jnp.bfloat16)
    w_out, b_out = params["final"]
    z = jnp.dot(h, w_out, preferred_element_type=jnp.float32) + b_out
    l2 = jnp.float32(0.0)
    for (w, bgb) in params["hidden"]:
        l2 = l2 + jnp.sum(w.astype(jnp.float32) ** 2) + jnp.sum(bgb[1] ** 2)
    l2 = l2 + jnp.sum(w_out.astype(jnp.float32) ** 2)
    return z[:, :dims["output"]], l2


# ---------------------------------------------------------------------------
if __name__ == "__main__":
    batch = 8
    input_size = 32
    hidden_sizes = (64, 128)
    output_size = 16

    key = jax.random.PRNGKey(0)
    key_p, key_x = jax.random.split(key)
    params = init_fc_layer_params(key_p, input_size, hidden_sizes, output_size)
    x = jax.random.normal(key_x, (batch, input_size), dtype=jnp.float32)

    out, l2_loss = fc_layer_forward(params, x)
    jax.block_until_ready(out)
    jax.block_until_ready(l2_loss)

    assert out.shape == (batch, output_size)
    assert l2_loss.shape == ()
    assert bool(jnp.isfinite(out).all())
    assert bool(jnp.isfinite(l2_loss))

    # Loose correctness check against a pure-JAX reference using the same
    # bf16-rounded weights (tanh-sigmoid / E[z^2]-mean^2 introduce tiny diffs).
    ref_out, ref_l2 = _reference_forward(params, x)
    assert bool(jnp.allclose(out, ref_out, atol=5e-2, rtol=5e-2))
    assert bool(jnp.allclose(l2_loss, ref_l2, rtol=1e-3))

    print("KERNEL_OK")
</pallas_src>

<mosaic_0001>
module attributes {stable_mosaic.version = 11 : i64} {
  func.func @kernel(%arg0: i32, %arg1: memref<8x128xbf16, #tpu.memory_space<vmem>>, %arg2: memref<128x128xbf16, #tpu.memory_space<vmem>>, %arg3: memref<8x128xf32, #tpu.memory_space<vmem>>, %arg4: memref<128x128xbf16, #tpu.memory_space<vmem>>, %arg5: memref<8x128xf32, #tpu.memory_space<vmem>>, %arg6: memref<128x128xbf16, #tpu.memory_space<vmem>>, %arg7: memref<1x128xf32, #tpu.memory_space<vmem>>, %arg8: memref<8x128xf32, #tpu.memory_space<vmem>>) attributes {dimension_semantics = [#tpu.dimension_semantics<parallel>], iteration_bounds = array<i64: 1>, scalar_prefetch = 0 : i64, scratch_operands = 0 : i64, tpu.core_type = #tpu.core_type<tc>, window_params = [{transform_indices = @transform_0, window_bounds = array<i64: 8, 128>}, {pipeline_mode = #tpu.pipeline_mode<synchronous>, transform_indices = @transform_1, window_bounds = array<i64: 128, 128>}, {pipeline_mode = #tpu.pipeline_mode<synchronous>, transform_indices = @transform_2, window_bounds = array<i64: 8, 128>}, {pipeline_mode = #tpu.pipeline_mode<synchronous>, transform_indices = @transform_3, window_bounds = array<i64: 128, 128>}, {pipeline_mode = #tpu.pipeline_mode<synchronous>, transform_indices = @transform_4, window_bounds = array<i64: 8, 128>}, {pipeline_mode = #tpu.pipeline_mode<synchronous>, transform_indices = @transform_5, window_bounds = array<i64: 128, 128>}, {pipeline_mode = #tpu.pipeline_mode<synchronous>, transform_indices = @transform_6, window_bounds = array<i64: 1, 128>}, {transform_indices = @transform_7, window_bounds = array<i64: 8, 128>}]} {
    %c0 = arith.constant 0 : index
    %c0_0 = arith.constant 0 : index
    %0 = vector.load %arg1[%c0, %c0_0] : memref<8x128xbf16, #tpu.memory_space<vmem>>, vector<8x128xbf16>
    %c0_1 = arith.constant 0 : index
    %c0_2 = arith.constant 0 : index
    %1 = vector.load %arg3[%c0_1, %c0_2] : memref<8x128xf32, #tpu.memory_space<vmem>>, vector<1x128xf32>
    %c1 = arith.constant 1 : index
    %c0_3 = arith.constant 0 : index
    %2 = vector.load %arg3[%c1, %c0_3] : memref<8x128xf32, #tpu.memory_space<vmem>>, vector<1x128xf32>
    %c2 = arith.constant 2 : index
    %c0_4 = arith.constant 0 : index
    %3 = vector.load %arg3[%c2, %c0_4] : memref<8x128xf32, #tpu.memory_space<vmem>>, vector<1x128xf32>
    %c0_5 = arith.constant 0 : index
    %c0_6 = arith.constant 0 : index
    %4 = vector.load %arg2[%c0_5, %c0_6] : memref<128x128xbf16, #tpu.memory_space<vmem>>, vector<128x128xbf16>
    %cst = arith.constant dense<0.000000e+00> : vector<8x128xf32>
    %5 = tpu.matmul %0, %4, %cst {dimension_numbers = #tpu.dot_dimension_numbers<[1], [0], [0], [1], [0, 0, 1, 1], [], []>} : vector<8x128xbf16>, vector<128x128xbf16>, vector<8x128xf32> -> vector<8x128xf32>
    %6 = vector.broadcast %1 : vector<1x128xf32> to vector<8x128xf32>
    %7 = arith.addf %5, %6 : vector<8x128xf32>
    %cst_7 = arith.constant dense<0.000000e+00> : vector<8xf32>
    %8 = vector.multi_reduction <add>, %7, %cst_7 [1] : vector<8x128xf32> to vector<8xf32>
    %9 = vector.shape_cast %8 : vector<8xf32> to vector<8x1xf32>
    %cst_8 = arith.constant 1.562500e-02 : f32
    %10 = vector.broadcast %cst_8 : f32 to vector<8x1xf32>
    %11 = arith.mulf %9, %10 : vector<8x1xf32>
    %12 = arith.mulf %7, %7 : vector<8x128xf32>
    %cst_9 = arith.constant dense<0.000000e+00> : vector<8xf32>
    %13 = vector.multi_reduction <add>, %12, %cst_9 [1] : vector<8x128xf32> to vector<8xf32>
    %14 = vector.shape_cast %13 : vector<8xf32> to vector<8x1xf32>
    %cst_10 = arith.constant 1.562500e-02 : f32
    %15 = vector.broadcast %cst_10 : f32 to vector<8x1xf32>
    %16 = arith.mulf %14, %15 : vector<8x1xf32>
    %17 = arith.mulf %11, %11 : vector<8x1xf32>
    %18 = arith.subf %16, %17 : vector<8x1xf32>
    %cst_11 = arith.constant 0.000000e+00 : f32
    %19 = vector.broadcast %cst_11 : f32 to vector<8x1xf32>
    %20 = arith.maximumf %18, %19 : vector<8x1xf32>
    %21 = vector.broadcast %11 : vector<8x1xf32> to vector<8x128xf32>
    %22 = arith.subf %7, %21 : vector<8x128xf32>
    %cst_12 = arith.constant 9.99999974E-6 : f32
    %23 = vector.broadcast %cst_12 : f32 to vector<8x1xf32>
    %24 = arith.addf %20, %23 : vector<8x1xf32>
    %25 = math.rsqrt %24 : vector<8x1xf32>
    %26 = vector.broadcast %25 : vector<8x1xf32> to vector<8x128xf32>
    %27 = arith.mulf %22, %26 : vector<8x128xf32>
    %28 = vector.broadcast %2 : vector<1x128xf32> to vector<8x128xf32>
    %29 = arith.mulf %27, %28 : vector<8x128xf32>
    %30 = vector.broadcast %3 : vector<1x128xf32> to vector<8x128xf32>
    %31 = arith.addf %29, %30 : vector<8x128xf32>
    %cst_13 = arith.constant 5.000000e-01 : f32
    %32 = vector.broadcast %cst_13 : f32 to vector<8x128xf32>
    %33 = arith.mulf %32, %31 : vector<8x128xf32>
    %34 = math.tanh %33 : vector<8x128xf32>
    %cst_14 = arith.constant 5.000000e-01 : f32
    %35 = vector.broadcast %cst_14 : f32 to vector<8x128xf32>
    %36 = arith.mulf %35, %34 : vector<8x128xf32>
    %cst_15 = arith.constant 5.000000e-01 : f32
    %37 = vector.broadcast %cst_15 : f32 to vector<8x128xf32>
    %38 = arith.addf %36, %37 : vector<8x128xf32>
    %39 = arith.mulf %31, %38 : vector<8x128xf32>
    %40 = arith.truncf %39 : vector<8x128xf32> to vector<8x128xbf16>
    %c0_16 = arith.constant 0 : index
    %c0_17 = arith.constant 0 : index
    %41 = vector.load %arg5[%c0_16, %c0_17] : memref<8x128xf32, #tpu.memory_space<vmem>>, vector<1x128xf32>
    %c1_18 = arith.constant 1 : index
    %c0_19 = arith.constant 0 : index
    %42 = vector.load %arg5[%c1_18, %c0_19] : memref<8x128xf32, #tpu.memory_space<vmem>>, vector<1x128xf32>
    %c2_20 = arith.constant 2 : index
    %c0_21 = arith.constant 0 : index
    %43 = vector.load %arg5[%c2_20, %c0_21] : memref<8x128xf32, #tpu.memory_space<vmem>>, vector<1x128xf32>
    %c0_22 = arith.constant 0 : index
    %c0_23 = arith.constant 0 : index
    %44 = vector.load %arg4[%c0_22, %c0_23] : memref<128x128xbf16, #tpu.memory_space<vmem>>, vector<128x128xbf16>
    %cst_24 = arith.constant dense<0.000000e+00> : vector<8x128xf32>
    %45 = tpu.matmul %40, %44, %cst_24 {dimension_numbers = #tpu.dot_dimension_numbers<[1], [0], [0], [1], [0, 0, 1, 1], [], []>} : vector<8x128xbf16>, vector<128x128xbf16>, vector<8x128xf32> -> vector<8x128xf32>
    %46 = vector.broadcast %41 : vector<1x128xf32> to vector<8x128xf32>
    %47 = arith.addf %45, %46 : vector<8x128xf32>
    %cst_25 = arith.constant dense<0.000000e+00> : vector<8xf32>
    %48 = vector.multi_reduction <add>, %47, %cst_25 [1] : vector<8x128xf32> to vector<8xf32>
    %49 = vector.shape_cast %48 : vector<8xf32> to vector<8x1xf32>
    %cst_26 = arith.constant 7.812500e-03 : f32
    %50 = vector.broadcast %cst_26 : f32 to vector<8x1xf32>
    %51 = arith.mulf %49, %50 : vector<8x1xf32>
    %52 = arith.mulf %47, %47 : vector<8x128xf32>
    %cst_27 = arith.constant dense<0.000000e+00> : vector<8xf32>
    %53 = vector.multi_reduction <add>, %52, %cst_27 [1] : vector<8x128xf32> to vector<8xf32>
    %54 = vector.shape_cast %53 : vector<8xf32> to vector<8x1xf32>
    %cst_28 = arith.constant 7.812500e-03 : f32
    %55 = vector.broadcast %cst_28 : f32 to vector<8x1xf32>
    %56 = arith.mulf %54, %55 : vector<8x1xf32>
    %57 = arith.mulf %51, %51 : vector<8x1xf32>
    %58 = arith.subf %56, %57 : vector<8x1xf32>
    %cst_29 = arith.constant 0.000000e+00 : f32
    %59 = vector.broadcast %cst_29 : f32 to vector<8x1xf32>
    %60 = arith.maximumf %58, %59 : vector<8x1xf32>
    %61 = vector.broadcast %51 : vector<8x1xf32> to vector<8x128xf32>
    %62 = arith.subf %47, %61 : vector<8x128xf32>
    %cst_30 = arith.constant 9.99999974E-6 : f32
    %63 = vector.broadcast %cst_30 : f32 to vector<8x1xf32>
    %64 = arith.addf %60, %63 : vector<8x1xf32>
    %65 = math.rsqrt %64 : vector<8x1xf32>
    %66 = vector.broadcast %65 : vector<8x1xf32> to vector<8x128xf32>
    %67 = arith.mulf %62, %66 : vector<8x128xf32>
    %68 = vector.broadcast %42 : vector<1x128xf32> to vector<8x128xf32>
    %69 = arith.mulf %67, %68 : vector<8x128xf32>
    %70 = vector.broadcast %43 : vector<1x128xf32> to vector<8x128xf32>
    %71 = arith.addf %69, %70 : vector<8x128xf32>
    %cst_31 = arith.constant 5.000000e-01 : f32
    %72 = vector.broadcast %cst_31 : f32 to vector<8x128xf32>
    %73 = arith.mulf %72, %71 : vector<8x128xf32>
    %74 = math.tanh %73 : vector<8x128xf32>
    %cst_32 = arith.constant 5.000000e-01 : f32
    %75 = vector.broadcast %cst_32 : f32 to vector<8x128xf32>
    %76 = arith.mulf %75, %74 : vector<8x128xf32>
    %cst_33 = arith.constant 5.000000e-01 : f32
    %77 = vector.broadcast %cst_33 : f32 to vector<8x128xf32>
    %78 = arith.addf %76, %77 : vector<8x128xf32>
    %79 = arith.mulf %71, %78 : vector<8x128xf32>
    %80 = arith.truncf %79 : vector<8x128xf32> to vector<8x128xbf16>
    %c0_34 = arith.constant 0 : index
    %c0_35 = arith.constant 0 : index
    %81 = vector.load %arg6[%c0_34, %c0_35] : memref<128x128xbf16, #tpu.memory_space<vmem>>, vector<128x128xbf16>
    %cst_36 = arith.constant dense<0.000000e+00> : vector<8x128xf32>
    %82 = tpu.matmul %80, %81, %cst_36 {dimension_numbers = #tpu.dot_dimension_numbers<[1], [0], [0], [1], [0, 0, 1, 1], [], []>} : vector<8x128xbf16>, vector<128x128xbf16>, vector<8x128xf32> -> vector<8x128xf32>
    %c0_37 = arith.constant 0 : index
    %c0_38 = arith.constant 0 : index
    %83 = vector.load %arg7[%c0_37, %c0_38] : memref<1x128xf32, #tpu.memory_space<vmem>>, vector<1x128xf32>
    %84 = vector.broadcast %83 : vector<1x128xf32> to vector<8x128xf32>
    %85 = arith.addf %82, %84 : vector<8x128xf32>
    %c0_39 = arith.constant 0 : index
    %c0_40 = arith.constant 0 : index
    %86 = vector.load %arg8[%c0_39, %c0_40] : memref<8x128xf32, #tpu.memory_space<vmem>>, vector<8x128xf32>
    tpu.vector_store %arg8[%c0_39, %c0_40], %85 {strides = array<i32>} : memref<8x128xf32, #tpu.memory_space<vmem>>, vector<8x128xf32>,
    return
  }
  func.func @transform_0(%arg0: i32) -> (i32, i32) {
    %c0_i32 = arith.constant 0 : i32
    %c0_i32_0 = arith.constant 0 : i32
    return %arg0, %c0_i32 : i32, i32
  }
  func.func @transform_1(%arg0: i32) -> (i32, i32) {
    %c0_i32 = arith.constant 0 : i32
    %c0_i32_0 = arith.constant 0 : i32
    %c0_i32_1 = arith.constant 0 : i32
    return %c0_i32, %c0_i32_0 : i32, i32
  }
  func.func @transform_2(%arg0: i32) -> (i32, i32) {
    %c0_i32 = arith.constant 0 : i32
    %c0_i32_0 = arith.constant 0 : i32
    %c0_i32_1 = arith.constant 0 : i32
    return %c0_i32, %c0_i32_0 : i32, i32
  }
  func.func @transform_3(%arg0: i32) -> (i32, i32) {
    %c0_i32 = arith.constant 0 : i32
    %c0_i32_0 = arith.constant 0 : i32
    %c0_i32_1 = arith.constant 0 : i32
    return %c0_i32, %c0_i32_0 : i32, i32
  }
  func.func @transform_4(%arg0: i32) -> (i32, i32) {
    %c0_i32 = arith.constant 0 : i32
    %c0_i32_0 = arith.constant 0 : i32
    %c0_i32_1 = arith.constant 0 : i32
    return %c0_i32, %c0_i32_0 : i32, i32
  }
  func.func @transform_5(%arg0: i32) -> (i32, i32) {
    %c0_i32 = arith.constant 0 : i32
    %c0_i32_0 = arith.constant 0 : i32
    %c0_i32_1 = arith.constant 0 : i32
    return %c0_i32, %c0_i32_0 : i32, i32
  }
  func.func @transform_6(%arg0: i32) -> (i32, i32) {
    %c0_i32 = arith.constant 0 : i32
    %c0_i32_0 = arith.constant 0 : i32
    %c0_i32_1 = arith.constant 0 : i32
    return %c0_i32, %c0_i32_0 : i32, i32
  }
  func.func @transform_7(%arg0: i32) -> (i32, i32) {
    %c0_i32 = arith.constant 0 : i32
    %c0_i32_0 = arith.constant 0 : i32
    return %arg0, %c0_i32 : i32, i32
  }
}

</mosaic_0001>

<llo_original>
// kernel: tpu_custom_call.1
$region0: #{tpu_custom_call.1}
  #allocation0 [shape = 'u32[]', space=smem, size = 0x4, offset = 0x4, fixed_abs, tag = 'smem constant byte address 0x4 - core index']
  #allocation1 [shape = 'u32[144,128]{1,0:T(1,128)}', space=vmem, size = 0x12000, scoped, tag = 'internal scratch']
  %s0 = inlined_call_operand.hbm [shape: bf16[8,128], index: 0, kind: input, shape index: {}]
  %s1 = inlined_call_operand.hbm [shape: bf16[128,128], index: 1, kind: input, shape index: {}]
  %s2 = inlined_call_operand.hbm [shape: f32[8,128], index: 2, kind: input, shape index: {}]
  %s3 = inlined_call_operand.hbm [shape: bf16[128,128], index: 3, kind: input, shape index: {}]
  %s4 = inlined_call_operand.hbm [shape: f32[8,128], index: 4, kind: input, shape index: {}]
  %s5 = inlined_call_operand.hbm [shape: bf16[128,128], index: 5, kind: input, shape index: {}]
  %s6 = inlined_call_operand.vmem [shape: f32[1,128], index: 6, kind: input, shape index: {}]
  %s7 = inlined_call_operand.hbm [shape: f32[8,128], index: 7, kind: output, shape index: {}]
  %s8 = sld [smem:[#allocation0]]
  $region62: #{tpu_custom_call.1} parent=0
    _
  %s10 = ssub.s32 1, %s8
  %s11 = scalar_select 0, %s10, %s8
  $region1: #{tpu_custom_call.1} parent=0
    #allocation2 [shape = 'u8[2048]{0}', space=vmem, size = 0x800, scoped, tag = 'input window, operand 0, single buffered']
    #allocation3 [shape = 's32[1]{0}', space=sflag, size = 0x4, scoped, tag = 'scoped memory for tpu_custom_call.1']
    #allocation4 [shape = 's32[1]{0}', space=sflag, size = 0x4, scoped, tag = 'scoped memory for tpu_custom_call.1']
    #allocation5 [shape = 'u8[32768]{0}', space=vmem, size = 0x8000, scoped, tag = 'input window, operand 1, single buffered']
    #allocation6 [shape = 's32[1]{0}', space=sflag, size = 0x4, scoped, tag = 'scoped memory for tpu_custom_call.1']
    #allocation7 [shape = 'u8[4096]{0}', space=vmem, size = 0x1000, scoped, tag = 'input window, operand 2, single buffered']
    #allocation8 [shape = 'u8[32768]{0}', space=vmem, size = 0x8000, scoped, tag = 'input window, operand 3, single buffered']
    #allocation9 [shape = 's32[1]{0}', space=sflag, size = 0x4, scoped, tag = 'scoped memory for tpu_custom_call.1']
    #allocation10 [shape = 'u8[4096]{0}', space=vmem, size = 0x1000, scoped, tag = 'input window, operand 4, single buffered']
    #allocation11 [shape = 'u8[32768]{0}', space=vmem, size = 0x8000, scoped, tag = 'input window, operand 5, single buffered']
    #allocation12 [shape = 's32[1]{0}', space=sflag, size = 0x4, scoped, tag = 'scoped memory for tpu_custom_call.1']
    #allocation13 [shape = 'u8[4096]{0}', space=vmem, size = 0x1000, scoped, tag = 'output window, operand 0, single buffered']
    %12 = vsyncpa [#allocation3], 0
    %13 = vsyncpa [#allocation6], 0
    %14 = vsyncpa [#allocation9], 0
    %15 = vsyncpa [#allocation12], 0
    %16 = vsyncpa [#allocation4], 0
    // Predicated region
    $region2: #{tpu_custom_call.1} parent=1 // pred_check
      _
    $region3: #{tpu_custom_call.1} parent=1 // pred_check_branch
      %18 = sbr.rel (0) target = $region5
    $region4: #{tpu_custom_call.1} parent=1 // pred_region
      %s20 = ssub.s32 64, 64
      %21 = vsyncadd [#allocation3], %s20
      %s23 = sshll.u32 [#allocation2], 4
      %s24 = int_to_ptr.vmem [resolvable:$true] %s23
      %26 = dma.hbm_to_vmem [thread:$0]  %s0, 64, %s24, [#allocation3]
    $region5: #{tpu_custom_call.1} parent=1 // pred_fallthru
      _
    // Predicated region
    $region6: #{tpu_custom_call.1} parent=1 // pred_check
      _
    $region7: #{tpu_custom_call.1} parent=1 // pred_check_branch
      %28 = sbr.rel (0) target = $region9
    $region8: #{tpu_custom_call.1} parent=1 // pred_region
      %s30 = ssub.s32 1024, 1024
      %31 = vsyncadd [#allocation6], %s30
      %s32 = sshll.u32 [#allocation5], 4
      %s33 = int_to_ptr.vmem [resolvable:$true] %s32
      %38 = dma.hbm_to_vmem [thread:$0]  %s1, 1024, %s33, [#allocation6], 64, 64, 4
    $region9: #{tpu_custom_call.1} parent=1 // pred_fallthru
      _
    // Predicated region
    $region10: #{tpu_custom_call.1} parent=1 // pred_check
      _
    $region11: #{tpu_custom_call.1} parent=1 // pred_check_branch
      %40 = sbr.rel (0) target = $region13
    $region12: #{tpu_custom_call.1} parent=1 // pred_region
      %s42 = ssub.s32 128, 128
      %43 = vsyncadd [#allocation6], %s42
      %s45 = sshll.u32 [#allocation7], 4
      %s46 = int_to_ptr.vmem [resolvable:$true] %s45
      %48 = dma.hbm_to_vmem [thread:$0]  %s2, 128, %s46, [#allocation6]
    $region13: #{tpu_custom_call.1} parent=1 // pred_fallthru
      _
    // Predicated region
    $region14: #{tpu_custom_call.1} parent=1 // pred_check
      _
    $region15: #{tpu_custom_call.1} parent=1 // pred_check_branch
      %50 = sbr.rel (0) target = $region17
    $region16: #{tpu_custom_call.1} parent=1 // pred_region
      %s52 = ssub.s32 1024, 1024
      %53 = vsyncadd [#allocation9], %s52
      %s54 = sshll.u32 [#allocation8], 4
      %s55 = int_to_ptr.vmem [resolvable:$true] %s54
      %60 = dma.hbm_to_vmem [thread:$0]  %s3, 1024, %s55, [#allocation9], 64, 64, 4
    $region17: #{tpu_custom_call.1} parent=1 // pred_fallthru
      _
    // Predicated region
    $region18: #{tpu_custom_call.1} parent=1 // pred_check
      _
    $region19: #{tpu_custom_call.1} parent=1 // pred_check_branch
      %62 = sbr.rel (0) target = $region21
    $region20: #{tpu_custom_call.1} parent=1 // pred_region
      %s64 = ssub.s32 128, 128
      %65 = vsyncadd [#allocation9], %s64
      %s67 = sshll.u32 [#allocation10], 4
      %s68 = int_to_ptr.vmem [resolvable:$true] %s67
      %70 = dma.hbm_to_vmem [thread:$0]  %s4, 128, %s68, [#allocation9]
    $region21: #{tpu_custom_call.1} parent=1 // pred_fallthru
      _
    // Predicated region
    $region22: #{tpu_custom_call.1} parent=1 // pred_check
      _
    $region23: #{tpu_custom_call.1} parent=1 // pred_check_branch
      %72 = sbr.rel (0) target = $region25
    $region24: #{tpu_custom_call.1} parent=1 // pred_region
      %s74 = ssub.s32 1024, 1024
      %75 = vsyncadd [#allocation12], %s74
      %s76 = sshll.u32 [#allocation11], 4
      %s77 = int_to_ptr.vmem [resolvable:$true] %s76
      %82 = dma.hbm_to_vmem [thread:$0]  %s5, 1024, %s77, [#allocation12], 64, 64, 4
    $region25: #{tpu_custom_call.1} parent=1 // pred_fallthru
      _
    // Predicated region
    $region26: #{tpu_custom_call.1} parent=1 // pred_check
      _
    $region27: #{tpu_custom_call.1} parent=1 // pred_check_branch
      %84 = sbr.rel (0) target = $region29
    $region28: #{tpu_custom_call.1} parent=1 // pred_region
      _
    $region29: #{tpu_custom_call.1} parent=1 // pred_fallthru
      _
    // Predicated region
    $region30: #{tpu_custom_call.1} parent=1 // pred_check
      _
    $region31: #{tpu_custom_call.1} parent=1 // pred_check_branch
      %86 = sbr.rel (0) target = $region33
    $region32: #{tpu_custom_call.1} parent=1 // pred_region
      %87 = dma.done [#allocation3], 64
    $region33: #{tpu_custom_call.1} parent=1 // pred_fallthru
      _
    // Predicated region
    $region34: #{tpu_custom_call.1} parent=1 // pred_check
      _
    $region35: #{tpu_custom_call.1} parent=1 // pred_check_branch
      %89 = sbr.rel (0) target = $region37
    $region36: #{tpu_custom_call.1} parent=1 // pred_region
      %90 = dma.done [#allocation6], 1024
    $region37: #{tpu_custom_call.1} parent=1 // pred_fallthru
      _
    // Predicated region
    $region38: #{tpu_custom_call.1} parent=1 // pred_check
      _
    $region39: #{tpu_custom_call.1} parent=1 // pred_check_branch
      %92 = sbr.rel (0) target = $region41
    $region40: #{tpu_custom_call.1} parent=1 // pred_region
      %93 = dma.done [#allocation6], 128
    $region41: #{tpu_custom_call.1} parent=1 // pred_fallthru
      _
    // Predicated region
    $region42: #{tpu_custom_call.1} parent=1 // pred_check
      _
    $region43: #{tpu_custom_call.1} parent=1 // pred_check_branch
      %95 = sbr.rel (0) target = $region45
    $region44: #{tpu_custom_call.1} parent=1 // pred_region
      %96 = dma.done [#allocation9], 1024
    $region45: #{tpu_custom_call.1} parent=1 // pred_fallthru
      _
    // Predicated region
    $region46: #{tpu_custom_call.1} parent=1 // pred_check
      _
    $region47: #{tpu_custom_call.1} parent=1 // pred_check_branch
      %98 = sbr.rel (0) target = $region49
    $region48: #{tpu_custom_call.1} parent=1 // pred_region
      %99 = dma.done [#allocation9], 128
    $region49: #{tpu_custom_call.1} parent=1 // pred_fallthru
      _
    // Predicated region
    $region50: #{tpu_custom_call.1} parent=1 // pred_check
      _
    $region51: #{tpu_custom_call.1} parent=1 // pred_check_branch
      %101 = sbr.rel (0) target = $region53
    $region52: #{tpu_custom_call.1} parent=1 // pred_region
      %102 = dma.done [#allocation12], 1024
    $region53: #{tpu_custom_call.1} parent=1 // pred_fallthru
      _
    %v104 = vld [vmem:[#allocation2] sm:$0xf]
    %v105 = vld [vmem:[#allocation7] sm:$0x1]
    %v106 = vld [vmem:[#allocation7 + $0x1] sm:$0x1]
    %v107 = vld [vmem:[#allocation7 + $0x2] sm:$0x1]
    %v108 = vld [vmem:[#allocation5] sm:$0xf]
    %v109 = vld [vmem:[#allocation5 + $0x4] sm:$0xf]
    %v110 = vld [vmem:[#allocation5 + $0x8] sm:$0xf]
    %v111 = vld [vmem:[#allocation5 + $0xc] sm:$0xf]
    %v112 = vld [vmem:[#allocation5 + $0x10] sm:$0xf]
    %v113 = vld [vmem:[#allocation5 + $0x14] sm:$0xf]
    %v114 = vld [vmem:[#allocation5 + $0x18] sm:$0xf]
    %v115 = vld [vmem:[#allocation5 + $0x1c] sm:$0xf]
    %v116 = vld [vmem:[#allocation5 + $0x20] sm:$0xf]
    %v117 = vld [vmem:[#allocation5 + $0x24] sm:$0xf]
    %v118 = vld [vmem:[#allocation5 + $0x28] sm:$0xf]
    %v119 = vld [vmem:[#allocation5 + $0x2c] sm:$0xf]
    %v120 = vld [vmem:[#allocation5 + $0x30] sm:$0xf]
    %v121 = vld [vmem:[#allocation5 + $0x34] sm:$0xf]
    %v122 = vld [vmem:[#allocation5 + $0x38] sm:$0xf]
    %v123 = vld [vmem:[#allocation5 + $0x3c] sm:$0xf]
    %v124 = vlaneseq
    %v125 = vshrl.u32 %v124, 7
    %v126 = vsub.s32 0, %v125
    %v127 = vrot.slane %v105, %v126
    %v144 = vunpack.c.l.b16 %v108
    %v145 = vunpack.c.l.b16 %v109
    %v146 = vunpack.c.l.b16 %v110
    %v147 = vunpack.c.l.b16 %v111
    %v148 = vunpack.c.l.b16 %v112
    %v149 = vunpack.c.l.b16 %v113
    %v150 = vunpack.c.l.b16 %v114
    %v151 = vunpack.c.l.b16 %v115
    %v152 = vunpack.c.l.b16 %v116
    %v153 = vunpack.c.l.b16 %v117
    %v154 = vunpack.c.l.b16 %v118
    %v155 = vunpack.c.l.b16 %v119
    %v156 = vunpack.c.l.b16 %v120
    %v157 = vunpack.c.l.b16 %v121
    %v158 = vunpack.c.l.b16 %v122
    %v159 = vunpack.c.l.b16 %v123
    %v160 = vpack.c.b16 %v145, %v144
    %v161 = vpack.c.b16 %v147, %v146
    %v162 = vpack.c.b16 %v149, %v148
    %v163 = vpack.c.b16 %v151, %v150
    %v164 = vpack.c.b16 %v153, %v152
    %v165 = vpack.c.b16 %v155, %v154
    %v166 = vpack.c.b16 %v157, %v156
    %v167 = vpack.c.b16 %v159, %v158
    %176 = vmatprep.subr.bf16.mxu0 0
    %177 = vmatpush1.bf16.msra.mxu0 %v167
    %178 = vmatprep.subr.bf16.mxu0 0
    %179 = vmatpush1.bf16.msra.mxu0 %v166
    %180 = vmatprep.subr.bf16.mxu0 0
    %181 = vmatpush1.bf16.msra.mxu0 %v165
    %182 = vmatprep.subr.bf16.mxu0 0
    %183 = vmatpush1.bf16.msra.mxu0 %v164
    %184 = vmatprep.subr.bf16.mxu0 0
    %185 = vmatpush1.bf16.msra.mxu0 %v163
    %186 = vmatprep.subr.bf16.mxu0 0
    %187 = vmatpush1.bf16.msra.mxu0 %v162
    %188 = vmatprep.subr.bf16.mxu0 0
    %189 = vmatpush1.bf16.msra.mxu0 %v161
    %190 = vmatprep.subr.bf16.mxu0 0
    %191 = vmatpush1.bf16.msra.mxu0 %v160
    %192 = vmatprep.subr.bf16.mxu0 0
    %193 = vmatpush2.bf16.msra.mxu0 0
    %194 = vmatprep.subr.bf16.mxu0 0
    %195 = vmatpush2.bf16.msra.mxu0 0
    %196 = vmatprep.subr.bf16.mxu0 0
    %197 = vmatpush2.bf16.msra.mxu0 0
    %198 = vmatprep.subr.bf16.mxu0 0
    %199 = vmatpush2.bf16.msra.mxu0 0
    %200 = vmatprep.subr.bf16.mxu0 0
    %201 = vmatpush2.bf16.msra.mxu0 0
    %202 = vmatprep.subr.bf16.mxu0 0
    %203 = vmatpush2.bf16.msra.mxu0 0
    %204 = vmatprep.subr.bf16.mxu0 0
    %205 = vmatpush2.bf16.msra.mxu0 0
    %206 = vmatprep.subr.bf16.mxu0 0
    %207 = vmatpush2.bf16.msra.mxu0 0
    %208 = vmatprep.mubr.bf16.mxu0 0
    %209 = vmatmul.mubr.bf16.gmra.mxu0 %v104
    %v210 = vpop.f32.mrf.mxu0
    %v211 = vadd.f32 %v127, %v210
    %v212 = vpop.f32.mrf.mxu0
    %v213 = vpop.f32.mrf.mxu0
    %v214 = vpop.f32.mrf.mxu0
    %215 = vdwg.mxu0
    %216 = vadd.xlane.f32.xlu0 %v211
    %v217 = vpop.xlane.xlu0 %216
    %v218 = vmul.f32 %v217, 0.015625
    %v219 = vmul.f32 %v211, %v211
    %220 = vadd.xlane.f32.xlu0 %v219
    %v221 = vpop.xlane.xlu0 %220
    %v222 = vmul.f32 %v221, 0.015625
    %v223 = vmul.f32 %v218, %v218
    %v224 = vsub.f32 %v222, %v223
    %v225 = vmax.f32 %v224, 0.0
    %v226 = vsub.f32 %v211, %v218
    %v227 = vadd.f32 %v225, 1e-05
    %v228 = vrsqrt.pop %v227
    %v229 = vmul.f32 %v226, %v228
    %v230 = vlaneseq
    %v231 = vshrl.u32 %v230, 7
    %v232 = vsub.s32 0, %v231
    %v233 = vrot.slane %v106, %v232
    %v234 = vmul.f32 %v229, %v233
    %v235 = vlaneseq
    %v236 = vshrl.u32 %v235, 7
    %v237 = vsub.s32 0, %v236
    %v238 = vrot.slane %v107, %v237
    %v239 = vadd.f32 %v234, %v238
    %v240 = vmul.f32 %v239, 0.5
    %v241 = vtanh.pop %v240
    %v242 = vmul.f32 %v241, 0.5
    %v243 = vadd.f32 %v242, 0.5
    %v244 = vmul.f32 %v239, %v243
    %v245 = vpack.c.bf16 %v244, %v244
    %v246 = vld [vmem:[#allocation10] sm:$0x1]
    %v247 = vld [vmem:[#allocation10 + $0x1] sm:$0x1]
    %v248 = vld [vmem:[#allocation10 + $0x2] sm:$0x1]
    %v249 = vld [vmem:[#allocation8] sm:$0xf]
    %v250 = vld [vmem:[#allocation8 + $0x4] sm:$0xf]
    %v251 = vld [vmem:[#allocation8 + $0x8] sm:$0xf]
    %v252 = vld [vmem:[#allocation8 + $0xc] sm:$0xf]
    %v253 = vld [vmem:[#allocation8 + $0x10] sm:$0xf]
    %v254 = vld [vmem:[#allocation8 + $0x14] sm:$0xf]
    %v255 = vld [vmem:[#allocation8 + $0x18] sm:$0xf]
    %v256 = vld [vmem:[#allocation8 + $0x1c] sm:$0xf]
    %v257 = vld [vmem:[#allocation8 + $0x20] sm:$0xf]
    %v258 = vld [vmem:[#allocation8 + $0x24] sm:$0xf]
    %v259 = vld [vmem:[#allocation8 + $0x28] sm:$0xf]
    %v260 = vld [vmem:[#allocation8 + $0x2c] sm:$0xf]
    %v261 = vld [vmem:[#allocation8 + $0x30] sm:$0xf]
    %v262 = vld [vmem:[#allocation8 + $0x34] sm:$0xf]
    %v263 = vld [vmem:[#allocation8 + $0x38] sm:$0xf]
    %v264 = vld [vmem:[#allocation8 + $0x3c] sm:$0xf]
    %v265 = vlaneseq
    %v266 = vshrl.u32 %v265, 7
    %v267 = vsub.s32 0, %v266
    %v268 = vrot.slane %v246, %v267
    %v285 = vunpack.c.l.b16 %v249
    %v286 = vunpack.c.l.b16 %v250
    %v287 = vunpack.c.l.b16 %v251
    %v288 = vunpack.c.l.b16 %v252
    %v289 = vunpack.c.l.b16 %v253
    %v290 = vunpack.c.l.b16 %v254
    %v291 = vunpack.c.l.b16 %v255
    %v292 = vunpack.c.l.b16 %v256
    %v293 = vunpack.c.l.b16 %v257
    %v294 = vunpack.c.l.b16 %v258
    %v295 = vunpack.c.l.b16 %v259
    %v296 = vunpack.c.l.b16 %v260
    %v297 = vunpack.c.l.b16 %v261
    %v298 = vunpack.c.l.b16 %v262
    %v299 = vunpack.c.l.b16 %v263
    %v300 = vunpack.c.l.b16 %v264
    %v301 = vpack.c.b16 %v286, %v285
    %v302 = vpack.c.b16 %v288, %v287
    %v303 = vpack.c.b16 %v290, %v289
    %v304 = vpack.c.b16 %v292, %v291
    %v305 = vpack.c.b16 %v294, %v293
    %v306 = vpack.c.b16 %v296, %v295
    %v307 = vpack.c.b16 %v298, %v297
    %v308 = vpack.c.b16 %v300, %v299
    %317 = vmatprep.subr.bf16.mxu0 0
    %318 = vmatpush1.bf16.msra.mxu0 %v308
    %319 = vmatprep.subr.bf16.mxu0 0
    %320 = vmatpush1.bf16.msra.mxu0 %v307
    %321 = vmatprep.subr.bf16.mxu0 0
    %322 = vmatpush1.bf16.msra.mxu0 %v306
    %323 = vmatprep.subr.bf16.mxu0 0
    %324 = vmatpush1.bf16.msra.mxu0 %v305
    %325 = vmatprep.subr.bf16.mxu0 0
    %326 = vmatpush1.bf16.msra.mxu0 %v304
    %327 = vmatprep.subr.bf16.mxu0 0
    %328 = vmatpush1.bf16.msra.mxu0 %v303
    %329 = vmatprep.subr.bf16.mxu0 0
    %330 = vmatpush1.bf16.msra.mxu0 %v302
    %331 = vmatprep.subr.bf16.mxu0 0
    %332 = vmatpush1.bf16.msra.mxu0 %v301
    %333 = vmatprep.subr.bf16.mxu0 0
    %334 = vmatpush2.bf16.msra.mxu0 0
    %335 = vmatprep.subr.bf16.mxu0 0
    %336 = vmatpush2.bf16.msra.mxu0 0
    %337 = vmatprep.subr.bf16.mxu0 0
    %338 = vmatpush2.bf16.msra.mxu0 0
    %339 = vmatprep.subr.bf16.mxu0 0
    %340 = vmatpush2.bf16.msra.mxu0 0
    %341 = vmatprep.subr.bf16.mxu0 0
    %342 = vmatpush2.bf16.msra.mxu0 0
    %343 = vmatprep.subr.bf16.mxu0 0
    %344 = vmatpush2.bf16.msra.mxu0 0
    %345 = vmatprep.subr.bf16.mxu0 0
    %346 = vmatpush2.bf16.msra.mxu0 0
    %347 = vmatprep.subr.bf16.mxu0 0
    %348 = vmatpush2.bf16.msra.mxu0 0
    %349 = vmatprep.mubr.bf16.mxu0 0
    %350 = vmatmul.mubr.bf16.gmra.mxu0 %v245
    %v351 = vpop.f32.mrf.mxu0
    %v352 = vadd.f32 %v268, %v351
    %v353 = vpop.f32.mrf.mxu0
    %v354 = vpop.f32.mrf.mxu0
    %v355 = vpop.f32.mrf.mxu0
    %356 = vdwg.mxu0
    %357 = vadd.xlane.f32.xlu0 %v352
    %v358 = vpop.xlane.xlu0 %357
    %v359 = vmul.f32 %v358, 0.0078125
    %v360 = vmul.f32 %v352, %v352
    %361 = vadd.xlane.f32.xlu0 %v360
    %v362 = vpop.xlane.xlu0 %361
    %v363 = vmul.f32 %v362, 0.0078125
    %v364 = vmul.f32 %v359, %v359
    %v365 = vsub.f32 %v363, %v364
    %v366 = vmax.f32 %v365, 0.0
    %v367 = vsub.f32 %v352, %v359
    %v368 = vadd.f32 %v366, 1e-05
    %v369 = vrsqrt.pop %v368
    %v370 = vmul.f32 %v367, %v369
    %v371 = vlaneseq
    %v372 = vshrl.u32 %v371, 7
    %v373 = vsub.s32 0, %v372
    %v374 = vrot.slane %v247, %v373
    %v375 = vmul.f32 %v370, %v374
    %v376 = vlaneseq
    %v377 = vshrl.u32 %v376, 7
    %v378 = vsub.s32 0, %v377
    %v379 = vrot.slane %v248, %v378
    %v380 = vadd.f32 %v375, %v379
    %v381 = vmul.f32 %v380, 0.5
    %v382 = vtanh.pop %v381
    %v383 = vmul.f32 %v382, 0.5
    %v384 = vadd.f32 %v383, 0.5
    %v385 = vmul.f32 %v380, %v384
    %v386 = vpack.c.bf16 %v385, %v385
    %v387 = vld [vmem:[#allocation11] sm:$0xf]
    %v388 = vld [vmem:[#allocation11 + $0x4] sm:$0xf]
    %v389 = vld [vmem:[#allocation11 + $0x8] sm:$0xf]
    %v390 = vld [vmem:[#allocation11 + $0xc] sm:$0xf]
    %v391 = vld [vmem:[#allocation11 + $0x10] sm:$0xf]
    %v392 = vld [vmem:[#allocation11 + $0x14] sm:$0xf]
    %v393 = vld [vmem:[#allocation11 + $0x18] sm:$0xf]
    %v394 = vld [vmem:[#allocation11 + $0x1c] sm:$0xf]
    %v395 = vld [vmem:[#allocation11 + $0x20] sm:$0xf]
    %v396 = vld [vmem:[#allocation11 + $0x24] sm:$0xf]
    %v397 = vld [vmem:[#allocation11 + $0x28] sm:$0xf]
    %v398 = vld [vmem:[#allocation11 + $0x2c] sm:$0xf]
    %v399 = vld [vmem:[#allocation11 + $0x30] sm:$0xf]
    %v400 = vld [vmem:[#allocation11 + $0x34] sm:$0xf]
    %v401 = vld [vmem:[#allocation11 + $0x38] sm:$0xf]
    %v402 = vld [vmem:[#allocation11 + $0x3c] sm:$0xf]
    %v403 = vld [vmem:[%s6] sm:$0x1]
    %v405 = vlaneseq
    %v406 = vshrl.u32 %v405, 7
    %v407 = vsub.s32 0, %v406
    %v408 = vrot.slane %v403, %v407
    %v426 = vunpack.c.l.b16 %v387
    %v427 = vunpack.c.l.b16 %v388
    %v428 = vunpack.c.l.b16 %v389
    %v429 = vunpack.c.l.b16 %v390
    %v430 = vunpack.c.l.b16 %v391
    %v431 = vunpack.c.l.b16 %v392
    %v432 = vunpack.c.l.b16 %v393
    %v433 = vunpack.c.l.b16 %v394
    %v434 = vunpack.c.l.b16 %v395
    %v435 = vunpack.c.l.b16 %v396
    %v436 = vunpack.c.l.b16 %v397
    %v437 = vunpack.c.l.b16 %v398
    %v438 = vunpack.c.l.b16 %v399
    %v439 = vunpack.c.l.b16 %v400
    %v440 = vunpack.c.l.b16 %v401
    %v441 = vunpack.c.l.b16 %v402
    %v442 = vpack.c.b16 %v427, %v426
    %v443 = vpack.c.b16 %v429, %v428
    %v444 = vpack.c.b16 %v431, %v430
    %v445 = vpack.c.b16 %v433, %v432
    %v446 = vpack.c.b16 %v435, %v434
    %v447 = vpack.c.b16 %v437, %v436
    %v448 = vpack.c.b16 %v439, %v438
    %v449 = vpack.c.b16 %v441, %v440
    %458 = vmatprep.subr.bf16.mxu0 0
    %459 = vmatpush1.bf16.msra.mxu0 %v449
    %460 = vmatprep.subr.bf16.mxu0 0
    %461 = vmatpush1.bf16.msra.mxu0 %v448
    %462 = vmatprep.subr.bf16.mxu0 0
    %463 = vmatpush1.bf16.msra.mxu0 %v447
    %464 = vmatprep.subr.bf16.mxu0 0
    %465 = vmatpush1.bf16.msra.mxu0 %v446
    %466 = vmatprep.subr.bf16.mxu0 0
    %467 = vmatpush1.bf16.msra.mxu0 %v445
    %468 = vmatprep.subr.bf16.mxu0 0
    %469 = vmatpush1.bf16.msra.mxu0 %v444
    %470 = vmatprep.subr.bf16.mxu0 0
    %471 = vmatpush1.bf16.msra.mxu0 %v443
    %472 = vmatprep.subr.bf16.mxu0 0
    %473 = vmatpush1.bf16.msra.mxu0 %v442
    %474 = vmatprep.subr.bf16.mxu0 0
    %475 = vmatpush2.bf16.msra.mxu0 0
    %476 = vmatprep.subr.bf16.mxu0 0
    %477 = vmatpush2.bf16.msra.mxu0 0
    %478 = vmatprep.subr.bf16.mxu0 0
    %479 = vmatpush2.bf16.msra.mxu0 0
    %480 = vmatprep.subr.bf16.mxu0 0
    %481 = vmatpush2.bf16.msra.mxu0 0
    %482 = vmatprep.subr.bf16.mxu0 0
    %483 = vmatpush2.bf16.msra.mxu0 0
    %484 = vmatprep.subr.bf16.mxu0 0
    %485 = vmatpush2.bf16.msra.mxu0 0
    %486 = vmatprep.subr.bf16.mxu0 0
    %487 = vmatpush2.bf16.msra.mxu0 0
    %488 = vmatprep.subr.bf16.mxu0 0
    %489 = vmatpush2.bf16.msra.mxu0 0
    %490 = vmatprep.mubr.bf16.mxu0 0
    %491 = vmatmul.mubr.bf16.gmra.mxu0 %v386
    %v492 = vpop.f32.mrf.mxu0
    %v493 = vadd.f32 %v408, %v492
    %v494 = vpop.f32.mrf.mxu0
    %v495 = vpop.f32.mrf.mxu0
    %v496 = vpop.f32.mrf.mxu0
    %497 = vdwg.mxu0
    %498 = vst [vmem:[#allocation13] sm:$0xff] %v493
    // Predicated region
    $region54: #{tpu_custom_call.1} parent=1 // pred_check
      _
    $region55: #{tpu_custom_call.1} parent=1 // pred_check_branch
      %500 = sbr.rel (0) target = $region57
    $region56: #{tpu_custom_call.1} parent=1 // pred_region
      %s502 = ssub.s32 128, 128
      %503 = vsyncadd [#allocation4], %s502
      %s505 = sshll.u32 [#allocation13], 4
      %s506 = int_to_ptr.vmem [resolvable:$true] %s505
      %508 = dma.vmem_to_hbm [thread:$0]  %s506, 128, %s7, [#allocation4]
    $region57: #{tpu_custom_call.1} parent=1 // pred_fallthru
      _
    // Predicated region
    $region58: #{tpu_custom_call.1} parent=1 // pred_check
      _
    $region59: #{tpu_custom_call.1} parent=1 // pred_check_branch
      %510 = sbr.rel (0) target = $region61
    $region60: #{tpu_custom_call.1} parent=1 // pred_region
      %511 = dma.done [#allocation4], 128
    $region61: #{tpu_custom_call.1} parent=1 // pred_fallthru
      _
    %512 = vsyncpa [#allocation3], 1
    %513 = vsyncpa [#allocation6], 1
    %514 = vsyncpa [#allocation9], 1
    %515 = vsyncpa [#allocation12], 1
    %516 = vsyncpa [#allocation4], 1

</llo_original>
